<compile_context>
chip_gen: v7x
topology: tpu7x:2x2x1
jax: 0.10.0
libtpu: 0.0.40
codegen_flags: <defaults>
</compile_context>

<pallas_src>
import jax
import jax.numpy as jnp
from jax.experimental import pallas as pl
from jax.experimental.pallas import tpu as pltpu

NEG_SLOPE = 0.01  # torch.nn.LeakyReLU default negative_slope

_VMEM_LIMIT_BYTES = 40 * 1024 * 1024      # safe on v5e/v6e (128 MiB) and v7x (64 MiB)
_VMEM_TILE_BUDGET = 24 * 1024 * 1024      # tiles sized against this (headroom)


def _round_up(x, n):
    return ((x + n - 1) // n) * n


def _mlp_kernel(x_ref, w1_ref, w2_ref, b2_ref, w3_ref, b3_ref, o_ref):
    # x_ref:  (TM, in_channel)                 [compute dtype, e.g. bf16]
    # w1_ref: (in_channel, dim_h_p)            Linear(in_channel, dim_h, bias=False)
    # w2_ref: (dim_h_p, dim_h_p), b2: (1, dim_h_p) f32
    # w3_ref: (dim_h_p, dim_out_p), b3: (1, dim_out_p) f32  ("linear_zero")
    cdtype = w1_ref.dtype
    x = x_ref[...]

    h1 = jnp.dot(x, w1_ref[...], preferred_element_type=jnp.float32)
    h1 = jnp.where(h1 > 0, h1, NEG_SLOPE * h1)                    # LeakyReLU

    h2 = jnp.dot(h1.astype(cdtype), w2_ref[...],
                 preferred_element_type=jnp.float32) + b2_ref[...]
    h2 = jnp.where(h2 > 0, h2, NEG_SLOPE * h2)                    # LeakyReLU

    out = jnp.dot(h2.astype(cdtype), w3_ref[...],
                  preferred_element_type=jnp.float32) + b3_ref[...]
    o_ref[...] = out.astype(o_ref.dtype)


def _pick_tile_m(m, in_ch, dim_h_p, dim_out_p, compute_bytes, max_tile_m,
                 vmem_budget_bytes):
    """Biggest MXU/sublane-friendly row tile that fits the VMEM budget."""
    # Resident weights/biases (conservatively assume double-buffered copies).
    weight_bytes = 2 * ((in_ch * dim_h_p + dim_h_p * dim_h_p + dim_h_p * dim_out_p)
                        * compute_bytes + (dim_h_p + dim_out_p) * 4)
    avail = max(vmem_budget_bytes - weight_bytes, 1 << 20)
    # Per-row cost: double-buffered x block + double-buffered out block
    # + f32 intermediates (h1, h2, out) materialized inside the kernel body.
    per_row = (2 * in_ch * compute_bytes
               + 2 * dim_out_p * jnp.dtype(jnp.float32).itemsize
               + 2 * dim_h_p * 4 + dim_out_p * 4)
    vmem_cap = max(avail // per_row, 8)

    tile = min(max_tile_m, vmem_cap, _round_up(m, 8))
    tile = _round_up(tile, 8) if tile < 128 else (tile // 128) * 128
    # v7x has 2 TensorCores: keep >=2 grid steps when there is enough work so
    # the "parallel" row axis can shard across both cores.
    if m > 2 * 128 and pl.cdiv(m, tile) < 2:
        tile = max(128, _round_up(pl.cdiv(m, 2), 128))
    return int(max(tile, 8))


def linear_a1d_forward(h, params, c=None, *, compute_dtype=jnp.bfloat16,
                       max_tile_m=1024, interpret=False):
    """Pallas implementation of LinearA1D.forward.

    h: (..., dim_in), c: optional (..., dim_c) concatenated on the last axis.
    params: w1 (in_channel, dim_h), w2 (dim_h, dim_h), b2 (dim_h,),
            w3 (dim_h, dim_out), b3 (dim_out,)
    compute_dtype: matmul-input dtype (bf16 default; f32 accumulation always).
    """
    if c is not None:
        h = jnp.concatenate([h, c], axis=-1)

    w1, w2, b2, w3, b3 = (params["w1"], params["w2"], params["b2"],
                          params["w3"], params["b3"])
    in_channel, dim_h = w1.shape
    dim_out = w3.shape[1]
    assert h.shape[-1] == in_channel
    assert w2.shape == (dim_h, dim_h)

    out_dtype = h.dtype
    lead_shape = h.shape[:-1]
    x = h.reshape(-1, in_channel).astype(compute_dtype)
    m = x.shape[0]

    # Lane-pad the hidden/output feature dims of the *weights* (one-time, tiny)
    # so every matmul N-dim and the output store are lane-dense. The activation's
    # in_channel is left unpadded (block == full dim) to avoid a full copy of x;
    # the zero rows/cols are exact no-ops through the LeakyReLU MLP.
    dim_h_p = _round_up(dim_h, 128)
    dim_out_p = _round_up(dim_out, 128)

    def pad2(a, rows, cols):
        return jnp.pad(a, ((0, rows - a.shape[0]), (0, cols - a.shape[1])))

    w1p = pad2(w1, in_channel, dim_h_p).astype(compute_dtype)
    w2p = pad2(w2, dim_h_p, dim_h_p).astype(compute_dtype)
    w3p = pad2(w3, dim_h_p, dim_out_p).astype(compute_dtype)
    b2p = jnp.pad(b2, (0, dim_h_p - dim_h)).reshape(1, dim_h_p).astype(jnp.float32)
    b3p = jnp.pad(b3, (0, dim_out_p - dim_out)).reshape(1, dim_out_p).astype(jnp.float32)

    compute_bytes = jnp.dtype(compute_dtype).itemsize
    tile_m = _pick_tile_m(m, in_channel, dim_h_p, dim_out_p, compute_bytes,
                          max_tile_m, _VMEM_TILE_BUDGET)
    grid_m = pl.cdiv(m, tile_m)   # ragged last tile handled by masked partial block

    cost = pl.CostEstimate(
        flops=2 * m * (in_channel * dim_h_p + dim_h_p * dim_h_p
                       + dim_h_p * dim_out_p),
        transcendentals=0,
        bytes_accessed=(x.size * compute_bytes
                        + (w1p.size + w2p.size + w3p.size) * compute_bytes
                        + (b2p.size + b3p.size) * 4
                        + m * dim_out_p * jnp.dtype(out_dtype).itemsize))

    def wspec(shape):
        # Resident operand: constant block index across the grid => the pipeline
        # fetches it once and never re-DMAs it.
        return pl.BlockSpec(shape, lambda i, _n=len(shape): (0,) * _n)

    out = pl.pallas_call(
        _mlp_kernel,
        out_shape=jax.ShapeDtypeStruct((m, dim_out_p), out_dtype),
        grid_spec=pltpu.PrefetchScalarGridSpec(
            num_scalar_prefetch=0,
            grid=(grid_m,),
            in_specs=[
                pl.BlockSpec((tile_m, in_channel), lambda i: (i, 0)),  # x rows
                wspec((in_channel, dim_h_p)),                          # w1
                wspec((dim_h_p, dim_h_p)),                             # w2
                wspec((1, dim_h_p)),                                   # b2
                wspec((dim_h_p, dim_out_p)),                           # w3
                wspec((1, dim_out_p)),                                 # b3
            ],
            out_specs=pl.BlockSpec((tile_m, dim_out_p), lambda i: (i, 0)),
        ),
        compiler_params=pltpu.CompilerParams(
            dimension_semantics=("parallel",),
            vmem_limit_bytes=_VMEM_LIMIT_BYTES),
        cost_estimate=cost,
        interpret=interpret,
    )(x, w1p, w2p, b2p, w3p, b3p)

    out = out[:, :dim_out]
    return out.reshape(*lead_shape, dim_out)


def init_linear_a1d_params(key, dim_in, dim_h, dim_out, dim_c=None,
                           dtype=jnp.float32):
    """Deterministic synthetic parameters matching LinearA1D.__init__ shapes."""
    in_channel = dim_in if dim_c is None else dim_in + dim_c
    k1, k2, k3 = jax.random.split(key, 3)
    scale1 = 1.0 / jnp.sqrt(in_channel)
    scale2 = 1.0 / jnp.sqrt(dim_h)
    params = {
        # Linear(in_channel, dim_h, bias=False): stored as (in_channel, dim_h)
        "w1": (jax.random.uniform(k1, (in_channel, dim_h), dtype,
                                  minval=-1.0, maxval=1.0) * scale1),
        # Linear(dim_h, dim_h, bias=True)
        "w2": (jax.random.uniform(k2, (dim_h, dim_h), dtype,
                                  minval=-1.0, maxval=1.0) * scale2),
        "b2": (jax.random.uniform(k3, (dim_h,), dtype,
                                  minval=-1.0, maxval=1.0) * scale2),
        # linear_zero: Linear(dim_h, dim_out) with weights & bias zeroed
        "w3": jnp.zeros((dim_h, dim_out), dtype),
        "b3": jnp.zeros((dim_out,), dtype),
    }
    return params, in_channel


def _reference_forward(h, params, c=None):
    if c is not None:
        h = jnp.concatenate([h, c], axis=-1)
    y = h @ params["w1"]
    y = jnp.where(y > 0, y, NEG_SLOPE * y)
    y = y @ params["w2"] + params["b2"]
    y = jnp.where(y > 0, y, NEG_SLOPE * y)
    y = y @ params["w3"] + params["b3"]
    return y


if __name__ == "__main__":
    # Small shapes implied by the module: h is (batch, seq, dim_in), c (batch, seq, dim_c)
    batch, seq = 2, 8
    dim_in, dim_c, dim_h, dim_out = 4, 4, 32, 8

    key = jax.random.PRNGKey(0)
    kp, kh, kc = jax.random.split(key, 3)
    params, in_channel = init_linear_a1d_params(kp, dim_in, dim_h, dim_out, dim_c)

    h = jax.random.normal(kh, (batch, seq, dim_in), jnp.float32)
    c = jax.random.normal(kc, (batch, seq, dim_c), jnp.float32)

    # f32 compute path: tight check against the reference.
    out = jax.block_until_ready(
        linear_a1d_forward(h, params, c, compute_dtype=jnp.float32))
    ref = _reference_forward(h, params, c)
    assert out.shape == (batch, seq, dim_out), out.shape
    assert jnp.allclose(out, ref, atol=1e-5, rtol=1e-5), "mismatch vs reference"

    # The module zero-inits the final layer, so also exercise a non-zero last layer.
    params_nz = dict(params)
    params_nz["w3"] = jax.random.normal(jax.random.PRNGKey(7),
                                        (dim_h, dim_out), jnp.float32) * 0.1
    params_nz["b3"] = jax.random.normal(jax.random.PRNGKey(8),
                                        (dim_out,), jnp.float32) * 0.1
    out_nz = jax.block_until_ready(
        linear_a1d_forward(h, params_nz, c, compute_dtype=jnp.float32))
    ref_nz = _reference_forward(h, params_nz, c)
    assert jnp.allclose(out_nz, ref_nz, atol=1e-5, rtol=1e-5), "mismatch (nz)"

    # Default fast path: bf16 matmul inputs with f32 accumulation (looser tol).
    out_bf16 = jax.block_until_ready(linear_a1d_forward(h, params_nz, c))
    assert jnp.allclose(out_bf16, ref_nz, atol=5e-2, rtol=5e-2), "mismatch (bf16)"

    # Multi-tile + ragged row count: >1 grid step and a masked partial last
    # block, without any wrapper-side jnp.pad copy of the activation.
    h_big = jax.random.normal(jax.random.PRNGKey(3), (5, 41, dim_in), jnp.float32)
    c_big = jax.random.normal(jax.random.PRNGKey(4), (5, 41, dim_c), jnp.float32)
    out_big = jax.block_until_ready(
        linear_a1d_forward(h_big, params_nz, c_big,
                           compute_dtype=jnp.float32, max_tile_m=128))
    ref_big = _reference_forward(h_big, params_nz, c_big)
    assert jnp.allclose(out_big, ref_big, atol=1e-5, rtol=1e-5), "mismatch (ragged)"

    print("KERNEL_OK")
</pallas_src>

<mosaic_0001>
module attributes {stable_mosaic.version = 11 : i64} {
  func.func @_mlp_kernel(%arg0: i32, %arg1: memref<16x8xf32, #tpu.memory_space<vmem>>, %arg2: memref<8x128xf32, #tpu.memory_space<vmem>>, %arg3: memref<128x128xf32, #tpu.memory_space<vmem>>, %arg4: memref<1x128xf32, #tpu.memory_space<vmem>>, %arg5: memref<128x128xf32, #tpu.memory_space<vmem>>, %arg6: memref<1x128xf32, #tpu.memory_space<vmem>>, %arg7: memref<16x128xf32, #tpu.memory_space<vmem>>) attributes {dimension_semantics = [#tpu.dimension_semantics<parallel>], iteration_bounds = array<i64: 1>, scalar_prefetch = 0 : i64, scratch_operands = 0 : i64, tpu.core_type = #tpu.core_type<tc>, window_params = [{transform_indices = @transform_0, window_bounds = array<i64: 16, 8>}, {pipeline_mode = #tpu.pipeline_mode<synchronous>, transform_indices = @transform_1, window_bounds = array<i64: 8, 128>}, {pipeline_mode = #tpu.pipeline_mode<synchronous>, transform_indices = @transform_2, window_bounds = array<i64: 128, 128>}, {pipeline_mode = #tpu.pipeline_mode<synchronous>, transform_indices = @transform_3, window_bounds = array<i64: 1, 128>}, {pipeline_mode = #tpu.pipeline_mode<synchronous>, transform_indices = @transform_4, window_bounds = array<i64: 128, 128>}, {pipeline_mode = #tpu.pipeline_mode<synchronous>, transform_indices = @transform_5, window_bounds = array<i64: 1, 128>}, {transform_indices = @transform_6, window_bounds = array<i64: 16, 128>}]} {
    %c0 = arith.constant 0 : index
    %c0_0 = arith.constant 0 : index
    %0 = vector.load %arg1[%c0, %c0_0] : memref<16x8xf32, #tpu.memory_space<vmem>>, vector<16x8xf32>
    %c0_1 = arith.constant 0 : index
    %c0_2 = arith.constant 0 : index
    %1 = vector.load %arg2[%c0_1, %c0_2] : memref<8x128xf32, #tpu.memory_space<vmem>>, vector<8x128xf32>
    %cst = arith.constant dense<0.000000e+00> : vector<16x128xf32>
    %2 = tpu.matmul %0, %1, %cst {dimension_numbers = #tpu.dot_dimension_numbers<[1], [0], [0], [1], [0, 0, 1, 1], [], []>} : vector<16x8xf32>, vector<8x128xf32>, vector<16x128xf32> -> vector<16x128xf32>
    %cst_3 = arith.constant 0.000000e+00 : f32
    %3 = vector.broadcast %cst_3 : f32 to vector<16x128xf32>
    %4 = arith.cmpf ogt, %2, %3 : vector<16x128xf32>
    %cst_4 = arith.constant 0.00999999977 : f32
    %5 = vector.broadcast %cst_4 : f32 to vector<16x128xf32>
    %6 = arith.mulf %5, %2 : vector<16x128xf32>
    %7 = arith.select %4, %2, %6 : vector<16x128xi1>, vector<16x128xf32>
    %c0_5 = arith.constant 0 : index
    %c0_6 = arith.constant 0 : index
    %8 = vector.load %arg3[%c0_5, %c0_6] : memref<128x128xf32, #tpu.memory_space<vmem>>, vector<128x128xf32>
    %cst_7 = arith.constant dense<0.000000e+00> : vector<16x128xf32>
    %9 = tpu.matmul %7, %8, %cst_7 {dimension_numbers = #tpu.dot_dimension_numbers<[1], [0], [0], [1], [0, 0, 1, 1], [], []>} : vector<16x128xf32>, vector<128x128xf32>, vector<16x128xf32> -> vector<16x128xf32>
    %c0_8 = arith.constant 0 : index
    %c0_9 = arith.constant 0 : index
    %10 = vector.load %arg4[%c0_8, %c0_9] : memref<1x128xf32, #tpu.memory_space<vmem>>, vector<1x128xf32>
    %11 = vector.broadcast %10 : vector<1x128xf32> to vector<16x128xf32>
    %12 = arith.addf %9, %11 : vector<16x128xf32>
    %cst_10 = arith.constant 0.000000e+00 : f32
    %13 = vector.broadcast %cst_10 : f32 to vector<16x128xf32>
    %14 = arith.cmpf ogt, %12, %13 : vector<16x128xf32>
    %cst_11 = arith.constant 0.00999999977 : f32
    %15 = vector.broadcast %cst_11 : f32 to vector<16x128xf32>
    %16 = arith.mulf %15, %12 : vector<16x128xf32>
    %17 = arith.select %14, %12, %16 : vector<16x128xi1>, vector<16x128xf32>
    %c0_12 = arith.constant 0 : index
    %c0_13 = arith.constant 0 : index
    %18 = vector.load %arg5[%c0_12, %c0_13] : memref<128x128xf32, #tpu.memory_space<vmem>>, vector<128x128xf32>
    %cst_14 = arith.constant dense<0.000000e+00> : vector<16x128xf32>
    %19 = tpu.matmul %17, %18, %cst_14 {dimension_numbers = #tpu.dot_dimension_numbers<[1], [0], [0], [1], [0, 0, 1, 1], [], []>} : vector<16x128xf32>, vector<128x128xf32>, vector<16x128xf32> -> vector<16x128xf32>
    %c0_15 = arith.constant 0 : index
    %c0_16 = arith.constant 0 : index
    %20 = vector.load %arg6[%c0_15, %c0_16] : memref<1x128xf32, #tpu.memory_space<vmem>>, vector<1x128xf32>
    %21 = vector.broadcast %20 : vector<1x128xf32> to vector<16x128xf32>
    %22 = arith.addf %19, %21 : vector<16x128xf32>
    %c0_17 = arith.constant 0 : index
    %c0_18 = arith.constant 0 : index
    %23 = vector.load %arg7[%c0_17, %c0_18] : memref<16x128xf32, #tpu.memory_space<vmem>>, vector<16x128xf32>
    tpu.vector_store %arg7[%c0_17, %c0_18], %22 {strides = array<i32>} : memref<16x128xf32, #tpu.memory_space<vmem>>, vector<16x128xf32>,
    return
  }
  func.func @transform_0(%arg0: i32) -> (i32, i32) {
    %c0_i32 = arith.constant 0 : i32
    %c0_i32_0 = arith.constant 0 : i32
    return %arg0, %c0_i32 : i32, i32
  }
  func.func @transform_1(%arg0: i32) -> (i32, i32) {
    %c0_i32 = arith.constant 0 : i32
    %c0_i32_0 = arith.constant 0 : i32
    %c0_i32_1 = arith.constant 0 : i32
    return %c0_i32, %c0_i32_0 : i32, i32
  }
  func.func @transform_2(%arg0: i32) -> (i32, i32) {
    %c0_i32 = arith.constant 0 : i32
    %c0_i32_0 = arith.constant 0 : i32
    %c0_i32_1 = arith.constant 0 : i32
    return %c0_i32, %c0_i32_0 : i32, i32
  }
  func.func @transform_3(%arg0: i32) -> (i32, i32) {
    %c0_i32 = arith.constant 0 : i32
    %c0_i32_0 = arith.constant 0 : i32
    %c0_i32_1 = arith.constant 0 : i32
    return %c0_i32, %c0_i32_0 : i32, i32
  }
  func.func @transform_4(%arg0: i32) -> (i32, i32) {
    %c0_i32 = arith.constant 0 : i32
    %c0_i32_0 = arith.constant 0 : i32
    %c0_i32_1 = arith.constant 0 : i32
    return %c0_i32, %c0_i32_0 : i32, i32
  }
  func.func @transform_5(%arg0: i32) -> (i32, i32) {
    %c0_i32 = arith.constant 0 : i32
    %c0_i32_0 = arith.constant 0 : i32
    %c0_i32_1 = arith.constant 0 : i32
    return %c0_i32, %c0_i32_0 : i32, i32
  }
  func.func @transform_6(%arg0: i32) -> (i32, i32) {
    %c0_i32 = arith.constant 0 : i32
    %c0_i32_0 = arith.constant 0 : i32
    return %arg0, %c0_i32 : i32, i32
  }
}

</mosaic_0001>

<llo_original>
// kernel: tpu_custom_call.1
$region0: #{tpu_custom_call.1}
  #allocation0 [shape = 'u32[]', space=smem, size = 0x4, offset = 0x4, fixed_abs, tag = 'smem constant byte address 0x4 - core index']
  #allocation1 [shape = 'u32[144,128]{1,0:T(1,128)}', space=vmem, size = 0x12000, scoped, tag = 'internal scratch']
  %s0 = inlined_call_operand.vmem [shape: f32[16,8], index: 0, kind: input, shape index: {}]
  %s1 = inlined_call_operand.vmem [shape: f32[8,128], index: 1, kind: input, shape index: {}]
  %s2 = inlined_call_operand.hbm [shape: f32[128,128], index: 2, kind: input, shape index: {}]
  %s3 = inlined_call_operand.vmem [shape: f32[1,128], index: 3, kind: input, shape index: {}]
  %s4 = inlined_call_operand.hbm [shape: f32[128,128], index: 4, kind: input, shape index: {}]
  %s5 = inlined_call_operand.vmem [shape: f32[1,128], index: 5, kind: input, shape index: {}]
  %s6 = inlined_call_operand.hbm [shape: f32[16,128], index: 6, kind: output, shape index: {}]
  %s7 = sld [smem:[#allocation0]]
  $region42: #{tpu_custom_call.1} parent=0
    _
  %s9 = ssub.s32 1, %s7
  %s10 = scalar_select 0, %s9, %s7
  $region1: #{tpu_custom_call.1} parent=0
    #allocation2 [shape = 'u8[65536]{0}', space=vmem, size = 0x10000, scoped, tag = 'input window, operand 2, single buffered']
    #allocation3 [shape = 's32[1]{0}', space=sflag, size = 0x4, scoped, tag = 'scoped memory for tpu_custom_call.1']
    #allocation4 [shape = 's32[1]{0}', space=sflag, size = 0x4, scoped, tag = 'scoped memory for tpu_custom_call.1']
    #allocation5 [shape = 'u8[65536]{0}', space=vmem, size = 0x10000, scoped, tag = 'input window, operand 4, single buffered']
    #allocation6 [shape = 's32[1]{0}', space=sflag, size = 0x4, scoped, tag = 'scoped memory for tpu_custom_call.1']
    #allocation7 [shape = 'u8[8192]{0}', space=vmem, size = 0x2000, scoped, tag = 'output window, operand 0, single buffered']
    %11 = vsyncpa [#allocation3], 0
    %12 = vsyncpa [#allocation6], 0
    %13 = vsyncpa [#allocation4], 0
    // Predicated region
    $region2: #{tpu_custom_call.1} parent=1 // pred_check
      _
    $region3: #{tpu_custom_call.1} parent=1 // pred_check_branch
      %15 = sbr.rel (0) target = $region5
    $region4: #{tpu_custom_call.1} parent=1 // pred_region
      _
    $region5: #{tpu_custom_call.1} parent=1 // pred_fallthru
      _
    // Predicated region
    $region6: #{tpu_custom_call.1} parent=1 // pred_check
      _
    $region7: #{tpu_custom_call.1} parent=1 // pred_check_branch
      %17 = sbr.rel (0) target = $region9
    $region8: #{tpu_custom_call.1} parent=1 // pred_region
      _
    $region9: #{tpu_custom_call.1} parent=1 // pred_fallthru
      _
    // Predicated region
    $region10: #{tpu_custom_call.1} parent=1 // pred_check
      _
    $region11: #{tpu_custom_call.1} parent=1 // pred_check_branch
      %19 = sbr.rel (0) target = $region13
    $region12: #{tpu_custom_call.1} parent=1 // pred_region
      %s21 = ssub.s32 2048, 2048
      %22 = vsyncadd [#allocation3], %s21
      %s23 = sshll.u32 [#allocation2], 4
      %s24 = int_to_ptr.vmem [resolvable:$true] %s23
      %29 = dma.hbm_to_vmem [thread:$0]  %s2, 2048, %s24, [#allocation3], 128, 128, 8
    $region13: #{tpu_custom_call.1} parent=1 // pred_fallthru
      _
    // Predicated region
    $region14: #{tpu_custom_call.1} parent=1 // pred_check
      _
    $region15: #{tpu_custom_call.1} parent=1 // pred_check_branch
      %31 = sbr.rel (0) target = $region17
    $region16: #{tpu_custom_call.1} parent=1 // pred_region
      _
    $region17: #{tpu_custom_call.1} parent=1 // pred_fallthru
      _
    // Predicated region
    $region18: #{tpu_custom_call.1} parent=1 // pred_check
      _
    $region19: #{tpu_custom_call.1} parent=1 // pred_check_branch
      %33 = sbr.rel (0) target = $region21
    $region20: #{tpu_custom_call.1} parent=1 // pred_region
      %s35 = ssub.s32 2048, 2048
      %36 = vsyncadd [#allocation6], %s35
      %s37 = sshll.u32 [#allocation5], 4
      %s38 = int_to_ptr.vmem [resolvable:$true] %s37
      %43 = dma.hbm_to_vmem [thread:$0]  %s4, 2048, %s38, [#allocation6], 128, 128, 8
    $region21: #{tpu_custom_call.1} parent=1 // pred_fallthru
      _
    // Predicated region
    $region22: #{tpu_custom_call.1} parent=1 // pred_check
      _
    $region23: #{tpu_custom_call.1} parent=1 // pred_check_branch
      %45 = sbr.rel (0) target = $region25
    $region24: #{tpu_custom_call.1} parent=1 // pred_region
      _
    $region25: #{tpu_custom_call.1} parent=1 // pred_fallthru
      _
    // Predicated region
    $region26: #{tpu_custom_call.1} parent=1 // pred_check
      _
    $region27: #{tpu_custom_call.1} parent=1 // pred_check_branch
      %47 = sbr.rel (0) target = $region29
    $region28: #{tpu_custom_call.1} parent=1 // pred_region
      %48 = dma.done [#allocation3], 2048
    $region29: #{tpu_custom_call.1} parent=1 // pred_fallthru
      _
    // Predicated region
    $region30: #{tpu_custom_call.1} parent=1 // pred_check
      _
    $region31: #{tpu_custom_call.1} parent=1 // pred_check_branch
      %50 = sbr.rel (0) target = $region33
    $region32: #{tpu_custom_call.1} parent=1 // pred_region
      %51 = dma.done [#allocation6], 2048
    $region33: #{tpu_custom_call.1} parent=1 // pred_fallthru
      _
    %v52 = vld [vmem:[%s0] sm:$0xff]
    %v53 = vld [vmem:[%s0 + $0x8] sm:$0xff]
    %v54 = vld [vmem:[%s1] sm:$0xff]
    %vm55 = vcmask 64512
    %v57 = vsel %vm55, %v52, 0
    %v60 = vsel %vm55, %v53, 0
    %62 = vmatprep.subr.mxu0 0.0
    %63 = vmatpush1.msra.mxu0 %v54
    %64 = vmatprep.subr.mxu0 0.0
    %65 = vmatpush1.msra.mxu0 0.0
    %66 = vmatprep.subr.mxu0 0.0
    %67 = vmatpush1.msra.mxu0 0.0
    %68 = vmatprep.subr.mxu0 0.0
    %69 = vmatpush1.msra.mxu0 0.0
    %70 = vmatprep.subr.mxu0 0.0
    %71 = vmatpush1.msra.mxu0 0.0
    %72 = vmatprep.subr.mxu0 0.0
    %73 = vmatpush1.msra.mxu0 0.0
    %74 = vmatprep.subr.mxu0 0.0
    %75 = vmatpush1.msra.mxu0 0.0
    %76 = vmatprep.subr.mxu0 0.0
    %77 = vmatpush1.msra.mxu0 0.0
    %78 = vmatprep.subr.mxu0 0.0
    %79 = vmatpush1.msra.mxu0 0.0
    %80 = vmatprep.subr.mxu0 0.0
    %81 = vmatpush1.msra.mxu0 0.0
    %82 = vmatprep.subr.mxu0 0.0
    %83 = vmatpush1.msra.mxu0 0.0
    %84 = vmatprep.subr.mxu0 0.0
    %85 = vmatpush1.msra.mxu0 0.0
    %86 = vmatprep.subr.mxu0 0.0
    %87 = vmatpush1.msra.mxu0 0.0
    %88 = vmatprep.subr.mxu0 0.0
    %89 = vmatpush1.msra.mxu0 0.0
    %90 = vmatprep.subr.mxu0 0.0
    %91 = vmatpush1.msra.mxu0 0.0
    %92 = vmatprep.subr.mxu0 0.0
    %93 = vmatpush1.msra.mxu0 0.0
    %94 = vmatprep.subr.mxu0 0.0
    %95 = vmatpush1.msra.mxu0 0.0
    %96 = vmatprep.subr.mxu0 0.0
    %97 = vmatpush1.msra.mxu0 0.0
    %98 = vmatprep.subr.mxu0 0.0
    %99 = vmatpush1.msra.mxu0 0.0
    %100 = vmatprep.subr.mxu0 0.0
    %101 = vmatpush1.msra.mxu0 0.0
    %102 = vmatprep.subr.mxu0 0.0
    %103 = vmatpush1.msra.mxu0 0.0
    %104 = vmatprep.subr.mxu0 0.0
    %105 = vmatpush1.msra.mxu0 0.0
    %106 = vmatprep.subr.mxu0 0.0
    %107 = vmatpush1.msra.mxu0 0.0
    %108 = vmatprep.subr.mxu0 0.0
    %109 = vmatpush1.msra.mxu0 0.0
    %110 = vmatprep.subr.mxu0 0.0
    %111 = vmatpush1.msra.mxu0 0.0
    %112 = vmatprep.subr.mxu0 0.0
    %113 = vmatpush1.msra.mxu0 0.0
    %114 = vmatprep.subr.mxu0 0.0
    %115 = vmatpush1.msra.mxu0 0.0
    %116 = vmatprep.subr.mxu0 0.0
    %117 = vmatpush1.msra.mxu0 0.0
    %118 = vmatprep.subr.mxu0 0.0
    %119 = vmatpush1.msra.mxu0 0.0
    %120 = vmatprep.subr.mxu0 0.0
    %121 = vmatpush1.msra.mxu0 0.0
    %122 = vmatprep.subr.mxu0 0.0
    %123 = vmatpush1.msra.mxu0 0.0
    %124 = vmatprep.subr.mxu0 0.0
    %125 = vmatpush1.msra.mxu0 0.0
    %126 = vmatprep.mubr.f32.mxu0 0.0
    %127 = vmatmul.mubr.f32.gmra.mrb[0].mxu0 %v57
    %v128 = vpop.f32.mrb[0].mxu0
    %v129 = vadd.f32 0.0, %v128
    %v130 = vpop.f32.mrb[0].mxu0
    %131 = vmatprep.mubr.f32.mxu0 0.0
    %132 = vmatmul.mubr.f32.gmra.mrb[0].mxu0 %v60
    %v133 = vpop.f32.mrb[0].mxu0
    %v134 = vadd.f32 0.0, %v133
    %v135 = vpop.f32.mrb[0].mxu0
    %136 = vdwg.mxu0
    %vm137 = vcmp.gt.f32.partialorder %v129, 0.0
    %vm138 = vcmp.gt.f32.partialorder %v134, 0.0
    %v139 = vmul.f32 %v129, 0.01
    %v140 = vmul.f32 %v134, 0.01
    %v141 = vsel %vm137, %v129, %v139
    %v142 = vsel %vm138, %v134, %v140
    %v143 = vld [vmem:[#allocation2] sm:$0xff]
    %v144 = vld [vmem:[#allocation2 + $0x8] sm:$0xff]
    %v145 = vld [vmem:[#allocation2 + $0x10] sm:$0xff]
    %v146 = vld [vmem:[#allocation2 + $0x18] sm:$0xff]
    %v147 = vld [vmem:[#allocation2 + $0x20] sm:$0xff]
    %v148 = vld [vmem:[#allocation2 + $0x28] sm:$0xff]
    %v149 = vld [vmem:[#allocation2 + $0x30] sm:$0xff]
    %v150 = vld [vmem:[#allocation2 + $0x38] sm:$0xff]
    %v151 = vld [vmem:[#allocation2 + $0x40] sm:$0xff]
    %v152 = vld [vmem:[#allocation2 + $0x48] sm:$0xff]
    %v153 = vld [vmem:[#allocation2 + $0x50] sm:$0xff]
    %v154 = vld [vmem:[#allocation2 + $0x58] sm:$0xff]
    %v155 = vld [vmem:[#allocation2 + $0x60] sm:$0xff]
    %v156 = vld [vmem:[#allocation2 + $0x68] sm:$0xff]
    %v157 = vld [vmem:[#allocation2 + $0x70] sm:$0xff]
    %v158 = vld [vmem:[#allocation2 + $0x78] sm:$0xff]
    %v159 = vld [vmem:[%s3] sm:$0x1]
    %v161 = vlaneseq
    %v162 = vshrl.u32 %v161, 7
    %v163 = vsub.s32 0, %v162
    %v164 = vrot.slane %v159, %v163
    %166 = vmatprep.subr.mxu0 0.0
    %167 = vmatpush1.msra.mxu0 %v143
    %168 = vmatprep.subr.mxu0 0.0
    %169 = vmatpush1.msra.mxu0 %v144
    %170 = vmatprep.subr.mxu0 0.0
    %171 = vmatpush1.msra.mxu0 %v145
    %172 = vmatprep.subr.mxu0 0.0
    %173 = vmatpush1.msra.mxu0 %v146
    %174 = vmatprep.subr.mxu0 0.0
    %175 = vmatpush1.msra.mxu0 %v147
    %176 = vmatprep.subr.mxu0 0.0
    %177 = vmatpush1.msra.mxu0 %v148
    %178 = vmatprep.subr.mxu0 0.0
    %179 = vmatpush1.msra.mxu0 %v149
    %180 = vmatprep.subr.mxu0 0.0
    %181 = vmatpush1.msra.mxu0 %v150
    %182 = vmatprep.subr.mxu0 0.0
    %183 = vmatpush1.msra.mxu0 %v151
    %184 = vmatprep.subr.mxu0 0.0
    %185 = vmatpush1.msra.mxu0 %v152
    %186 = vmatprep.subr.mxu0 0.0
    %187 = vmatpush1.msra.mxu0 %v153
    %188 = vmatprep.subr.mxu0 0.0
    %189 = vmatpush1.msra.mxu0 %v154
    %190 = vmatprep.subr.mxu0 0.0
    %191 = vmatpush1.msra.mxu0 %v155
    %192 = vmatprep.subr.mxu0 0.0
    %193 = vmatpush1.msra.mxu0 %v156
    %194 = vmatprep.subr.mxu0 0.0
    %195 = vmatpush1.msra.mxu0 %v157
    %196 = vmatprep.subr.mxu0 0.0
    %197 = vmatpush1.msra.mxu0 %v158
    %198 = vmatprep.subr.mxu0 0.0
    %199 = vmatpush1.msra.mxu0 0.0
    %200 = vmatprep.subr.mxu0 0.0
    %201 = vmatpush1.msra.mxu0 0.0
    %202 = vmatprep.subr.mxu0 0.0
    %203 = vmatpush1.msra.mxu0 0.0
    %204 = vmatprep.subr.mxu0 0.0
    %205 = vmatpush1.msra.mxu0 0.0
    %206 = vmatprep.subr.mxu0 0.0
    %207 = vmatpush1.msra.mxu0 0.0
    %208 = vmatprep.subr.mxu0 0.0
    %209 = vmatpush1.msra.mxu0 0.0
    %210 = vmatprep.subr.mxu0 0.0
    %211 = vmatpush1.msra.mxu0 0.0
    %212 = vmatprep.subr.mxu0 0.0
    %213 = vmatpush1.msra.mxu0 0.0
    %214 = vmatprep.subr.mxu0 0.0
    %215 = vmatpush1.msra.mxu0 0.0
    %216 = vmatprep.subr.mxu0 0.0
    %217 = vmatpush1.msra.mxu0 0.0
    %218 = vmatprep.subr.mxu0 0.0
    %219 = vmatpush1.msra.mxu0 0.0
    %220 = vmatprep.subr.mxu0 0.0
    %221 = vmatpush1.msra.mxu0 0.0
    %222 = vmatprep.subr.mxu0 0.0
    %223 = vmatpush1.msra.mxu0 0.0
    %224 = vmatprep.subr.mxu0 0.0
    %225 = vmatpush1.msra.mxu0 0.0
    %226 = vmatprep.subr.mxu0 0.0
    %227 = vmatpush1.msra.mxu0 0.0
    %228 = vmatprep.subr.mxu0 0.0
    %229 = vmatpush1.msra.mxu0 0.0
    %230 = vmatprep.mubr.f32.mxu0 0.0
    %231 = vmatmul.mubr.f32.gmra.mrb[0].mxu0 %v141
    %v232 = vpop.f32.mrb[0].mxu0
    %v233 = vadd.f32 %v164, %v232
    %v234 = vpop.f32.mrb[0].mxu0
    %235 = vmatprep.mubr.f32.mxu0 0.0
    %236 = vmatmul.mubr.f32.gmra.mrb[0].mxu0 %v142
    %v237 = vpop.f32.mrb[0].mxu0
    %v238 = vadd.f32 %v164, %v237
    %v239 = vpop.f32.mrb[0].mxu0
    %240 = vdwg.mxu0
    %vm241 = vcmp.gt.f32.partialorder %v233, 0.0
    %vm242 = vcmp.gt.f32.partialorder %v238, 0.0
    %v243 = vmul.f32 %v233, 0.01
    %v244 = vmul.f32 %v238, 0.01
    %v245 = vsel %vm241, %v233, %v243
    %v246 = vsel %vm242, %v238, %v244
    %v247 = vld [vmem:[#allocation5] sm:$0xff]
    %v248 = vld [vmem:[#allocation5 + $0x8] sm:$0xff]
    %v249 = vld [vmem:[#allocation5 + $0x10] sm:$0xff]
    %v250 = vld [vmem:[#allocation5 + $0x18] sm:$0xff]
    %v251 = vld [vmem:[#allocation5 + $0x20] sm:$0xff]
    %v252 = vld [vmem:[#allocation5 + $0x28] sm:$0xff]
    %v253 = vld [vmem:[#allocation5 + $0x30] sm:$0xff]
    %v254 = vld [vmem:[#allocation5 + $0x38] sm:$0xff]
    %v255 = vld [vmem:[#allocation5 + $0x40] sm:$0xff]
    %v256 = vld [vmem:[#allocation5 + $0x48] sm:$0xff]
    %v257 = vld [vmem:[#allocation5 + $0x50] sm:$0xff]
    %v258 = vld [vmem:[#allocation5 + $0x58] sm:$0xff]
    %v259 = vld [vmem:[#allocation5 + $0x60] sm:$0xff]
    %v260 = vld [vmem:[#allocation5 + $0x68] sm:$0xff]
    %v261 = vld [vmem:[#allocation5 + $0x70] sm:$0xff]
    %v262 = vld [vmem:[#allocation5 + $0x78] sm:$0xff]
    %v263 = vld [vmem:[%s5] sm:$0x1]
    %v265 = vlaneseq
    %v266 = vshrl.u32 %v265, 7
    %v267 = vsub.s32 0, %v266
    %v268 = vrot.slane %v263, %v267
    %270 = vmatprep.subr.mxu0 0.0
    %271 = vmatpush1.msra.mxu0 %v247
    %272 = vmatprep.subr.mxu0 0.0
    %273 = vmatpush1.msra.mxu0 %v248
    %274 = vmatprep.subr.mxu0 0.0
    %275 = vmatpush1.msra.mxu0 %v249
    %276 = vmatprep.subr.mxu0 0.0
    %277 = vmatpush1.msra.mxu0 %v250
    %278 = vmatprep.subr.mxu0 0.0
    %279 = vmatpush1.msra.mxu0 %v251
    %280 = vmatprep.subr.mxu0 0.0
    %281 = vmatpush1.msra.mxu0 %v252
    %282 = vmatprep.subr.mxu0 0.0
    %283 = vmatpush1.msra.mxu0 %v253
    %284 = vmatprep.subr.mxu0 0.0
    %285 = vmatpush1.msra.mxu0 %v254
    %286 = vmatprep.subr.mxu0 0.0
    %287 = vmatpush1.msra.mxu0 %v255
    %288 = vmatprep.subr.mxu0 0.0
    %289 = vmatpush1.msra.mxu0 %v256
    %290 = vmatprep.subr.mxu0 0.0
    %291 = vmatpush1.msra.mxu0 %v257
    %292 = vmatprep.subr.mxu0 0.0
    %293 = vmatpush1.msra.mxu0 %v258
    %294 = vmatprep.subr.mxu0 0.0
    %295 = vmatpush1.msra.mxu0 %v259
    %296 = vmatprep.subr.mxu0 0.0
    %297 = vmatpush1.msra.mxu0 %v260
    %298 = vmatprep.subr.mxu0 0.0
    %299 = vmatpush1.msra.mxu0 %v261
    %300 = vmatprep.subr.mxu0 0.0
    %301 = vmatpush1.msra.mxu0 %v262
    %302 = vmatprep.subr.mxu0 0.0
    %303 = vmatpush1.msra.mxu0 0.0
    %304 = vmatprep.subr.mxu0 0.0
    %305 = vmatpush1.msra.mxu0 0.0
    %306 = vmatprep.subr.mxu0 0.0
    %307 = vmatpush1.msra.mxu0 0.0
    %308 = vmatprep.subr.mxu0 0.0
    %309 = vmatpush1.msra.mxu0 0.0
    %310 = vmatprep.subr.mxu0 0.0
    %311 = vmatpush1.msra.mxu0 0.0
    %312 = vmatprep.subr.mxu0 0.0
    %313 = vmatpush1.msra.mxu0 0.0
    %314 = vmatprep.subr.mxu0 0.0
    %315 = vmatpush1.msra.mxu0 0.0
    %316 = vmatprep.subr.mxu0 0.0
    %317 = vmatpush1.msra.mxu0 0.0
    %318 = vmatprep.subr.mxu0 0.0
    %319 = vmatpush1.msra.mxu0 0.0
    %320 = vmatprep.subr.mxu0 0.0
    %321 = vmatpush1.msra.mxu0 0.0
    %322 = vmatprep.subr.mxu0 0.0
    %323 = vmatpush1.msra.mxu0 0.0
    %324 = vmatprep.subr.mxu0 0.0
    %325 = vmatpush1.msra.mxu0 0.0
    %326 = vmatprep.subr.mxu0 0.0
    %327 = vmatpush1.msra.mxu0 0.0
    %328 = vmatprep.subr.mxu0 0.0
    %329 = vmatpush1.msra.mxu0 0.0
    %330 = vmatprep.subr.mxu0 0.0
    %331 = vmatpush1.msra.mxu0 0.0
    %332 = vmatprep.subr.mxu0 0.0
    %333 = vmatpush1.msra.mxu0 0.0
    %334 = vmatprep.mubr.f32.mxu0 0.0
    %335 = vmatmul.mubr.f32.gmra.mrb[0].mxu0 %v245
    %v336 = vpop.f32.mrb[0].mxu0
    %v337 = vadd.f32 %v268, %v336
    %v338 = vpop.f32.mrb[0].mxu0
    %339 = vmatprep.mubr.f32.mxu0 0.0
    %340 = vmatmul.mubr.f32.gmra.mrb[0].mxu0 %v246
    %v341 = vpop.f32.mrb[0].mxu0
    %v342 = vadd.f32 %v268, %v341
    %v343 = vpop.f32.mrb[0].mxu0
    %344 = vdwg.mxu0
    %345 = vst [vmem:[#allocation7] sm:$0xff] %v337
    %346 = vst [vmem:[#allocation7 + $0x8] sm:$0xff] %v342
    // Predicated region
    $region34: #{tpu_custom_call.1} parent=1 // pred_check
      _
    $region35: #{tpu_custom_call.1} parent=1 // pred_check_branch
      %348 = sbr.rel (0) target = $region37
    $region36: #{tpu_custom_call.1} parent=1 // pred_region
      %s350 = ssub.s32 256, 256
      %351 = vsyncadd [#allocation4], %s350
      %s352 = sshll.u32 [#allocation7], 4
      %s353 = int_to_ptr.vmem [resolvable:$true] %s352
      %358 = dma.vmem_to_hbm [thread:$0]  %s353, 256, %s6, [#allocation4], 128, 128, 8
    $region37: #{tpu_custom_call.1} parent=1 // pred_fallthru
      _
    // Predicated region
    $region38: #{tpu_custom_call.1} parent=1 // pred_check
      _
    $region39: #{tpu_custom_call.1} parent=1 // pred_check_branch
      %360 = sbr.rel (0) target = $region41
    $region40: #{tpu_custom_call.1} parent=1 // pred_region
      %361 = dma.done [#allocation4], 256
    $region41: #{tpu_custom_call.1} parent=1 // pred_fallthru
      _
    %362 = vsyncpa [#allocation3], 1
    %363 = vsyncpa [#allocation6], 1
    %364 = vsyncpa [#allocation4], 1

</llo_original>
